<compile_context>
chip_gen: v6e
topology: v6e:2x2x1
jax: 0.10.0
libtpu: 0.0.40
codegen_flags: <defaults>
</compile_context>

<pallas_src>
import math

import jax
import jax.numpy as jnp
from jax.experimental import pallas as pl
from jax.experimental.pallas import tpu as pltpu


# ----------------------------------------------------------------------------
# Fused kernel: depthwise 3x3 (+bias)  ->  1x1 conv (+bias), one (batch, row
# tile) grid step.  Zero padding of the 3x3 conv is done in-kernel.
# ----------------------------------------------------------------------------
def _upsample_fused_kernel(x_ref, top_ref, bot_ref, w1_ref, b1_ref, w2_ref,
                           b2_ref, o_ref):
    """Per-grid-step shapes (channels-last inside the kernel):
         x_ref   : (1, T, W, C)   bf16  row tile
         top_ref : (1, 1, W, C)   bf16  row above the tile (clamped at h=0)
         bot_ref : (1, 1, W, C)   bf16  row below the tile (clamped at h=H-1)
         w1_ref  : (9, C)         f32   depthwise taps, tap = dh*3 + dw
         b1_ref  : (1, C)         f32
         w2_ref  : (C, Cout)      bf16  pointwise weight (pre-transposed)
         b2_ref  : (1, Cout)      f32
         o_ref   : (1, T, W, Cout) bf16
    """
    _, T, W, C = x_ref.shape
    Cout = o_ref.shape[3]
    S = T * W                  # flattened spatial size of the output tile
    SE = (T + 2) * W           # flattened spatial size incl. the H halo rows

    ht = pl.program_id(1)
    n_ht = pl.num_programs(1)

    f32 = jnp.float32
    # Depthwise math in f32 (v5e VPU has no bf16); flatten (T,W) onto sublanes.
    x = x_ref[...].astype(f32).reshape(S, C)
    # Halo rows: zero them at the image border (their index_map was clamped).
    top = jnp.where(ht > 0, top_ref[...].astype(f32), 0.0).reshape(W, C)
    bot = jnp.where(ht < n_ht - 1, bot_ref[...].astype(f32), 0.0).reshape(W, C)

    # Halo-extended tile: rows [-1, T] of the image slab, flattened.
    xe = jnp.concatenate([top, x, bot], axis=0)                    # (SE, C)

    # Horizontal (dw) neighbours via XLU rotations + zero-pad edge masking.
    # In the flattened layout a +/-1 roll crosses row boundaries exactly at
    # the columns that must be zero-padded anyway, so one mask fixes both.
    wcol = jax.lax.broadcasted_iota(jnp.int32, (T + 2, W, C), 1).reshape(SE, C)
    x_lft = jnp.where(wcol == 0, 0.0, pltpu.roll(xe, 1, axis=0))        # x[.., w-1]
    x_rgt = jnp.where(wcol == W - 1, 0.0, pltpu.roll(xe, SE - 1, axis=0))  # x[.., w+1]

    # Depthwise 3x3 accumulation on the VPU: vertical taps are cheap aligned
    # slices (offset dh*W) of the three pre-shifted slabs.
    w1 = w1_ref[...]                                               # (9, C)
    acc = jnp.zeros((S, C), f32)
    for dh in range(3):
        lo = dh * W
        acc = acc + x_lft[lo:lo + S] * w1[dh * 3 + 0]
        acc = acc + xe[lo:lo + S] * w1[dh * 3 + 1]
        acc = acc + x_rgt[lo:lo + S] * w1[dh * 3 + 2]
    acc = acc + b1_ref[...]                                        # conv1 bias

    # 1x1 conv == matmul on the MXU: bf16 operands, f32 accumulation.
    a = acc.astype(jnp.bfloat16)                                   # (S, C)
    y = jnp.dot(a, w2_ref[...], preferred_element_type=jnp.float32)
    y = y + b2_ref[...]                                            # conv2 bias
    o_ref[...] = y.reshape(1, T, W, Cout).astype(o_ref.dtype)


# ----------------------------------------------------------------------------
# Tile / VMEM sizing helpers
# ----------------------------------------------------------------------------
def _choose_tile_h(H, W, C, Cout, budget_bytes=24 * 1024 * 1024):
    """Largest divisor of H whose per-step working set fits the budget."""
    def step_bytes(t):
        io = 2 * ((t * W * C + 2 * W * C) * 2 + t * W * Cout * 2)   # dbl-buffered bf16 blocks
        tmp = (4 * (t + 2) * W * C + 2 * t * W * C) * 4 + t * W * Cout * 4  # f32 temps
        wts = 2 * (9 * C * 4 + C * 4 + C * Cout * 2 + Cout * 4)
        return io + tmp + wts
    for t in range(H, 0, -1):
        if H % t == 0 and step_bytes(t) <= budget_bytes:
            return t
    return 1


def _vmem_limit_bytes():
    # v7x: 64 MiB/TC -> cap below it; v5e/v6e: 128 MiB -> allow up to 96 MiB.
    try:
        cap = int(pltpu.get_tpu_info().vmem_capacity_bytes)
    except Exception:
        cap = 64 * 1024 * 1024
    return max(32 * 1024 * 1024, min((cap * 3) // 4, 96 * 1024 * 1024))


# ----------------------------------------------------------------------------
# Wrapper (module boundary: NCHW in / NCHW out, like the PyTorch module)
# ----------------------------------------------------------------------------
def upsample_forward(params, x, *, tile_h=None):
    """x: (B, C, H, W) f32  ->  (B, 2C, H, W) f32   (Upsample.forward)."""
    B, C, H, W = x.shape
    Cout = params["w2"].shape[0]

    # Single layout conversion + downcast at the module boundary (no jnp.pad).
    xl = jnp.transpose(x, (0, 2, 3, 1)).astype(jnp.bfloat16)       # (B, H, W, C)

    w1 = jnp.transpose(params["w1"].reshape(C, 9), (1, 0)).astype(jnp.float32)  # (9, C)
    b1 = params["b1"].reshape(1, C).astype(jnp.float32)
    w2 = jnp.transpose(params["w2"], (1, 0)).astype(jnp.bfloat16)  # (C, Cout)
    b2 = params["b2"].reshape(1, Cout).astype(jnp.float32)

    T = tile_h if tile_h is not None else _choose_tile_h(H, W, C, Cout)
    assert H % T == 0, (H, T)
    n_ht = H // T

    out_nhwc = pl.pallas_call(
        _upsample_fused_kernel,
        out_shape=jax.ShapeDtypeStruct((B, H, W, Cout), jnp.bfloat16),
        grid=(B, n_ht),
        in_specs=[
            # Row tile of the input.
            pl.BlockSpec((1, T, W, C), lambda b, h: (b, h, 0, 0)),
            # Single-row halos; index maps clamp at the image border and the
            # kernel zeroes them there (conv padding=1 semantics).
            pl.BlockSpec((1, 1, W, C),
                         lambda b, h: (b, jnp.maximum(h * T - 1, 0), 0, 0)),
            pl.BlockSpec((1, 1, W, C),
                         lambda b, h: (b, jnp.minimum((h + 1) * T, H - 1), 0, 0)),
            # Weights / biases (small; default buffering is fine).
            pl.BlockSpec((9, C), lambda b, h: (0, 0)),
            pl.BlockSpec((1, C), lambda b, h: (0, 0)),
            pl.BlockSpec((C, Cout), lambda b, h: (0, 0)),
            pl.BlockSpec((1, Cout), lambda b, h: (0, 0)),
        ],
        out_specs=pl.BlockSpec((1, T, W, Cout), lambda b, h: (b, h, 0, 0)),
        compiler_params=pltpu.CompilerParams(
            dimension_semantics=("parallel", "parallel"),  # B x row-tiles on v7x cores
            vmem_limit_bytes=_vmem_limit_bytes(),
        ),
    )(xl, xl, xl, w1, b1, w2, b2)

    # Back to NCHW f32 at the module boundary.
    return jnp.transpose(out_nhwc.astype(jnp.float32), (0, 3, 1, 2))


# ----------------------------------------------------------------------------
# Pure-JAX reference (for a correctness check of the fused kernel)
# ----------------------------------------------------------------------------
def upsample_reference(params, x):
    dim = x.shape[1]
    w1 = params["w1"].reshape(dim, 1, 3, 3)
    y = jax.lax.conv_general_dilated(
        x, w1, window_strides=(1, 1), padding=((1, 1), (1, 1)),
        dimension_numbers=("NCHW", "OIHW", "NCHW"),
        feature_group_count=dim)
    y = y + params["b1"].reshape(1, dim, 1, 1)
    w2 = params["w2"].reshape(params["w2"].shape[0], dim, 1, 1)
    z = jax.lax.conv_general_dilated(
        y, w2, window_strides=(1, 1), padding="VALID",
        dimension_numbers=("NCHW", "OIHW", "NCHW"))
    return z + params["b2"].reshape(1, -1, 1, 1)


# ----------------------------------------------------------------------------
# Deterministic synthetic params (mirrors Upsample(dim).__init__)
# ----------------------------------------------------------------------------
def init_upsample(key, dim):
    k1, k2, k3, k4 = jax.random.split(key, 4)
    dim_out = dim * 2
    return {
        # conv1: depthwise 3x3, groups=dim  -> per-channel (dim, 3, 3) + bias
        "w1": jax.random.normal(k1, (dim, 3, 3), jnp.float32) * (1.0 / 3.0),
        "b1": jax.random.normal(k2, (dim,), jnp.float32) * 0.05,
        # conv2: 1x1 conv dim -> 2*dim  (weight stored (Cout, Cin)) + bias
        "w2": jax.random.normal(k3, (dim_out, dim), jnp.float32) * (1.0 / math.sqrt(dim)),
        "b2": jax.random.normal(k4, (dim_out,), jnp.float32) * 0.05,
    }


# ----------------------------------------------------------------------------
if __name__ == "__main__":
    key = jax.random.PRNGKey(0)
    kp, kx = jax.random.split(key)

    # Small shapes consistent with the module: Upsample(dim=64) on a
    # (B=2, C=64, 16, 16) activation -> output (2, 128, 16, 16).
    # tile_h=8 forces two row tiles per image so both halo paths are tested.
    B, dim, H, W = 2, 64, 16, 16
    params = init_upsample(kp, dim)
    x = jax.random.normal(kx, (B, dim, H, W), jnp.float32)

    run = jax.jit(lambda xi: upsample_forward(params, xi, tile_h=8))
    out = jax.block_until_ready(run(x))

    assert out.shape == (B, 2 * dim, H, W), out.shape
    assert bool(jnp.all(jnp.isfinite(out)))

    # Correctness vs. pure-JAX f32 reference (tolerance covers bf16 I/O and
    # bf16 MXU operands).
    ref = jax.block_until_ready(upsample_reference(params, x))
    assert bool(jnp.allclose(out, ref, rtol=3e-2, atol=3e-2)), (
        float(jnp.max(jnp.abs(out - ref))))

    print("KERNEL_OK")
</pallas_src>

<mosaic_0001>
module attributes {stable_mosaic.version = 11 : i64} {
  func.func @_upsample_fused_kernel(%arg0: i32, %arg1: i32, %arg2: memref<1x8x16x64xbf16, #tpu.memory_space<vmem>>, %arg3: memref<1x1x16x64xbf16, #tpu.memory_space<vmem>>, %arg4: memref<1x1x16x64xbf16, #tpu.memory_space<vmem>>, %arg5: memref<9x64xf32, #tpu.memory_space<vmem>>, %arg6: memref<1x64xf32, #tpu.memory_space<vmem>>, %arg7: memref<64x128xbf16, #tpu.memory_space<vmem>>, %arg8: memref<1x128xf32, #tpu.memory_space<vmem>>, %arg9: memref<1x8x16x128xbf16, #tpu.memory_space<vmem>>) attributes {dimension_semantics = [#tpu.dimension_semantics<parallel>, #tpu.dimension_semantics<parallel>], iteration_bounds = array<i64: 2, 2>, scalar_prefetch = 0 : i64, scratch_operands = 0 : i64, tpu.core_type = #tpu.core_type<tc>, window_params = [{transform_indices = @transform_0, window_bounds = array<i64: 1, 8, 16, 64>}, {transform_indices = @transform_1, window_bounds = array<i64: 1, 1, 16, 64>}, {transform_indices = @transform_2, window_bounds = array<i64: 1, 1, 16, 64>}, {pipeline_mode = #tpu.pipeline_mode<synchronous>, transform_indices = @transform_3, window_bounds = array<i64: 9, 64>}, {pipeline_mode = #tpu.pipeline_mode<synchronous>, transform_indices = @transform_4, window_bounds = array<i64: 1, 64>}, {pipeline_mode = #tpu.pipeline_mode<synchronous>, transform_indices = @transform_5, window_bounds = array<i64: 64, 128>}, {pipeline_mode = #tpu.pipeline_mode<synchronous>, transform_indices = @transform_6, window_bounds = array<i64: 1, 128>}, {transform_indices = @transform_7, window_bounds = array<i64: 1, 8, 16, 128>}]} {
    %c0 = arith.constant 0 : index
    %c0_0 = arith.constant 0 : index
    %c0_1 = arith.constant 0 : index
    %c0_2 = arith.constant 0 : index
    %0 = vector.load %arg2[%c0, %c0_0, %c0_1, %c0_2] : memref<1x8x16x64xbf16, #tpu.memory_space<vmem>>, vector<1x8x16x64xbf16>
    %1 = arith.extf %0 : vector<1x8x16x64xbf16> to vector<1x8x16x64xf32>
    %2 = vector.shape_cast %1 : vector<1x8x16x64xf32> to vector<128x64xf32>
    %c0_i32 = arith.constant 0 : i32
    %3 = arith.cmpi sgt, %arg1, %c0_i32 : i32
    %c0_3 = arith.constant 0 : index
    %c0_4 = arith.constant 0 : index
    %c0_5 = arith.constant 0 : index
    %c0_6 = arith.constant 0 : index
    %4 = vector.load %arg3[%c0_3, %c0_4, %c0_5, %c0_6] : memref<1x1x16x64xbf16, #tpu.memory_space<vmem>>, vector<1x1x16x64xbf16>
    %5 = arith.extf %4 : vector<1x1x16x64xbf16> to vector<1x1x16x64xf32>
    %cst = arith.constant 0.000000e+00 : f32
    %6 = vector.broadcast %cst : f32 to vector<1x1x16x64xf32>
    %7 = arith.select %3, %5, %6 : vector<1x1x16x64xf32>
    %8 = vector.shape_cast %7 : vector<1x1x16x64xf32> to vector<16x64xf32>
    %c1_i32 = arith.constant 1 : i32
    %9 = arith.cmpi slt, %arg1, %c1_i32 : i32
    %c0_7 = arith.constant 0 : index
    %c0_8 = arith.constant 0 : index
    %c0_9 = arith.constant 0 : index
    %c0_10 = arith.constant 0 : index
    %10 = vector.load %arg4[%c0_7, %c0_8, %c0_9, %c0_10] : memref<1x1x16x64xbf16, #tpu.memory_space<vmem>>, vector<1x1x16x64xbf16>
    %11 = arith.extf %10 : vector<1x1x16x64xbf16> to vector<1x1x16x64xf32>
    %cst_11 = arith.constant 0.000000e+00 : f32
    %12 = vector.broadcast %cst_11 : f32 to vector<1x1x16x64xf32>
    %13 = arith.select %9, %11, %12 : vector<1x1x16x64xf32>
    %14 = vector.shape_cast %13 : vector<1x1x16x64xf32> to vector<16x64xf32>
    %15 = tpu.concatenate %8, %2, %14 in 0 : vector<16x64xf32>, vector<128x64xf32>, vector<16x64xf32> -> vector<160x64xf32>
    %16 = tpu.iota {dimensions = array<i32: 1>} : vector<10x16x64xi32>
    %17 = vector.shape_cast %16 : vector<10x16x64xi32> to vector<160x64xi32>
    %c0_i32_12 = arith.constant 0 : i32
    %18 = vector.broadcast %c0_i32_12 : i32 to vector<160x64xi32>
    %19 = arith.cmpi eq, %17, %18 : vector<160x64xi32>
    %c1_i32_13 = arith.constant 1 : i32
    %20 = tpu.dynamic_rotate %15 by %c1_i32_13 dim 0 : vector<160x64xf32>, i32 -> vector<160x64xf32>
    %cst_14 = arith.constant 0.000000e+00 : f32
    %21 = vector.broadcast %cst_14 : f32 to vector<160x64xf32>
    %22 = arith.select %19, %21, %20 : vector<160x64xi1>, vector<160x64xf32>
    %c15_i32 = arith.constant 15 : i32
    %23 = vector.broadcast %c15_i32 : i32 to vector<160x64xi32>
    %24 = arith.cmpi eq, %17, %23 : vector<160x64xi32>
    %c159_i32 = arith.constant 159 : i32
    %25 = tpu.dynamic_rotate %15 by %c159_i32 dim 0 : vector<160x64xf32>, i32 -> vector<160x64xf32>
    %cst_15 = arith.constant 0.000000e+00 : f32
    %26 = vector.broadcast %cst_15 : f32 to vector<160x64xf32>
    %27 = arith.select %24, %26, %25 : vector<160x64xi1>, vector<160x64xf32>
    %c0_16 = arith.constant 0 : index
    %c0_17 = arith.constant 0 : index
    %28 = vector.load %arg5[%c0_16, %c0_17] : memref<9x64xf32, #tpu.memory_space<vmem>>, vector<9x64xf32>
    %cst_18 = arith.constant 0.000000e+00 : f32
    %29 = vector.broadcast %cst_18 : f32 to vector<128x64xf32>
    %30 = vector.extract_strided_slice %22 {offsets = [0, 0], sizes = [128, 64], strides = [1, 1]} : vector<160x64xf32> to vector<128x64xf32>
    %31 = vector.extract_strided_slice %28 {offsets = [0, 0], sizes = [1, 64], strides = [1, 1]} : vector<9x64xf32> to vector<1x64xf32>
    %32 = vector.shape_cast %31 : vector<1x64xf32> to vector<64xf32>
    %33 = vector.shape_cast %32 : vector<64xf32> to vector<1x64xf32>
    %34 = vector.broadcast %33 : vector<1x64xf32> to vector<128x64xf32>
    %35 = arith.mulf %30, %34 : vector<128x64xf32>
    %36 = arith.addf %29, %35 : vector<128x64xf32>
    %37 = vector.extract_strided_slice %15 {offsets = [0, 0], sizes = [128, 64], strides = [1, 1]} : vector<160x64xf32> to vector<128x64xf32>
    %38 = vector.extract_strided_slice %28 {offsets = [1, 0], sizes = [1, 64], strides = [1, 1]} : vector<9x64xf32> to vector<1x64xf32>
    %39 = vector.shape_cast %38 : vector<1x64xf32> to vector<64xf32>
    %40 = vector.shape_cast %39 : vector<64xf32> to vector<1x64xf32>
    %41 = vector.broadcast %40 : vector<1x64xf32> to vector<128x64xf32>
    %42 = arith.mulf %37, %41 : vector<128x64xf32>
    %43 = arith.addf %36, %42 : vector<128x64xf32>
    %44 = vector.extract_strided_slice %27 {offsets = [0, 0], sizes = [128, 64], strides = [1, 1]} : vector<160x64xf32> to vector<128x64xf32>
    %45 = vector.extract_strided_slice %28 {offsets = [2, 0], sizes = [1, 64], strides = [1, 1]} : vector<9x64xf32> to vector<1x64xf32>
    %46 = vector.shape_cast %45 : vector<1x64xf32> to vector<64xf32>
    %47 = vector.shape_cast %46 : vector<64xf32> to vector<1x64xf32>
    %48 = vector.broadcast %47 : vector<1x64xf32> to vector<128x64xf32>
    %49 = arith.mulf %44, %48 : vector<128x64xf32>
    %50 = arith.addf %43, %49 : vector<128x64xf32>
    %51 = vector.extract_strided_slice %22 {offsets = [16, 0], sizes = [128, 64], strides = [1, 1]} : vector<160x64xf32> to vector<128x64xf32>
    %52 = vector.extract_strided_slice %28 {offsets = [3, 0], sizes = [1, 64], strides = [1, 1]} : vector<9x64xf32> to vector<1x64xf32>
    %53 = vector.shape_cast %52 : vector<1x64xf32> to vector<64xf32>
    %54 = vector.shape_cast %53 : vector<64xf32> to vector<1x64xf32>
    %55 = vector.broadcast %54 : vector<1x64xf32> to vector<128x64xf32>
    %56 = arith.mulf %51, %55 : vector<128x64xf32>
    %57 = arith.addf %50, %56 : vector<128x64xf32>
    %58 = vector.extract_strided_slice %15 {offsets = [16, 0], sizes = [128, 64], strides = [1, 1]} : vector<160x64xf32> to vector<128x64xf32>
    %59 = vector.extract_strided_slice %28 {offsets = [4, 0], sizes = [1, 64], strides = [1, 1]} : vector<9x64xf32> to vector<1x64xf32>
    %60 = vector.shape_cast %59 : vector<1x64xf32> to vector<64xf32>
    %61 = vector.shape_cast %60 : vector<64xf32> to vector<1x64xf32>
    %62 = vector.broadcast %61 : vector<1x64xf32> to vector<128x64xf32>
    %63 = arith.mulf %58, %62 : vector<128x64xf32>
    %64 = arith.addf %57, %63 : vector<128x64xf32>
    %65 = vector.extract_strided_slice %27 {offsets = [16, 0], sizes = [128, 64], strides = [1, 1]} : vector<160x64xf32> to vector<128x64xf32>
    %66 = vector.extract_strided_slice %28 {offsets = [5, 0], sizes = [1, 64], strides = [1, 1]} : vector<9x64xf32> to vector<1x64xf32>
    %67 = vector.shape_cast %66 : vector<1x64xf32> to vector<64xf32>
    %68 = vector.shape_cast %67 : vector<64xf32> to vector<1x64xf32>
    %69 = vector.broadcast %68 : vector<1x64xf32> to vector<128x64xf32>
    %70 = arith.mulf %65, %69 : vector<128x64xf32>
    %71 = arith.addf %64, %70 : vector<128x64xf32>
    %72 = vector.extract_strided_slice %22 {offsets = [32, 0], sizes = [128, 64], strides = [1, 1]} : vector<160x64xf32> to vector<128x64xf32>
    %73 = vector.extract_strided_slice %28 {offsets = [6, 0], sizes = [1, 64], strides = [1, 1]} : vector<9x64xf32> to vector<1x64xf32>
    %74 = vector.shape_cast %73 : vector<1x64xf32> to vector<64xf32>
    %75 = vector.shape_cast %74 : vector<64xf32> to vector<1x64xf32>
    %76 = vector.broadcast %75 : vector<1x64xf32> to vector<128x64xf32>
    %77 = arith.mulf %72, %76 : vector<128x64xf32>
    %78 = arith.addf %71, %77 : vector<128x64xf32>
    %79 = vector.extract_strided_slice %15 {offsets = [32, 0], sizes = [128, 64], strides = [1, 1]} : vector<160x64xf32> to vector<128x64xf32>
    %80 = vector.extract_strided_slice %28 {offsets = [7, 0], sizes = [1, 64], strides = [1, 1]} : vector<9x64xf32> to vector<1x64xf32>
    %81 = vector.shape_cast %80 : vector<1x64xf32> to vector<64xf32>
    %82 = vector.shape_cast %81 : vector<64xf32> to vector<1x64xf32>
    %83 = vector.broadcast %82 : vector<1x64xf32> to vector<128x64xf32>
    %84 = arith.mulf %79, %83 : vector<128x64xf32>
    %85 = arith.addf %78, %84 : vector<128x64xf32>
    %86 = vector.extract_strided_slice %27 {offsets = [32, 0], sizes = [128, 64], strides = [1, 1]} : vector<160x64xf32> to vector<128x64xf32>
    %87 = vector.extract_strided_slice %28 {offsets = [8, 0], sizes = [1, 64], strides = [1, 1]} : vector<9x64xf32> to vector<1x64xf32>
    %88 = vector.shape_cast %87 : vector<1x64xf32> to vector<64xf32>
    %89 = vector.shape_cast %88 : vector<64xf32> to vector<1x64xf32>
    %90 = vector.broadcast %89 : vector<1x64xf32> to vector<128x64xf32>
    %91 = arith.mulf %86, %90 : vector<128x64xf32>
    %92 = arith.addf %85, %91 : vector<128x64xf32>
    %c0_19 = arith.constant 0 : index
    %c0_20 = arith.constant 0 : index
    %93 = vector.load %arg6[%c0_19, %c0_20] : memref<1x64xf32, #tpu.memory_space<vmem>>, vector<1x64xf32>
    %94 = vector.broadcast %93 : vector<1x64xf32> to vector<128x64xf32>
    %95 = arith.addf %92, %94 : vector<128x64xf32>
    %96 = arith.truncf %95 : vector<128x64xf32> to vector<128x64xbf16>
    %c0_21 = arith.constant 0 : index
    %c0_22 = arith.constant 0 : index
    %97 = vector.load %arg7[%c0_21, %c0_22] : memref<64x128xbf16, #tpu.memory_space<vmem>>, vector<64x128xbf16>
    %cst_23 = arith.constant dense<0.000000e+00> : vector<128x128xf32>
    %98 = tpu.matmul %96, %97, %cst_23 {dimension_numbers = #tpu.dot_dimension_numbers<[1], [0], [0], [1], [0, 0, 1, 1], [], []>} : vector<128x64xbf16>, vector<64x128xbf16>, vector<128x128xf32> -> vector<128x128xf32>
    %c0_24 = arith.constant 0 : index
    %c0_25 = arith.constant 0 : index
    %99 = vector.load %arg8[%c0_24, %c0_25] : memref<1x128xf32, #tpu.memory_space<vmem>>, vector<1x128xf32>
    %100 = vector.broadcast %99 : vector<1x128xf32> to vector<128x128xf32>
    %101 = arith.addf %98, %100 : vector<128x128xf32>
    %102 = vector.shape_cast %101 : vector<128x128xf32> to vector<1x8x16x128xf32>
    %103 = arith.truncf %102 : vector<1x8x16x128xf32> to vector<1x8x16x128xbf16>
    %c0_26 = arith.constant 0 : index
    %c0_27 = arith.constant 0 : index
    %c0_28 = arith.constant 0 : index
    %c0_29 = arith.constant 0 : index
    %104 = vector.load %arg9[%c0_26, %c0_27, %c0_28, %c0_29] : memref<1x8x16x128xbf16, #tpu.memory_space<vmem>>, vector<1x8x16x128xbf16>
    tpu.vector_store %arg9[%c0_26, %c0_27, %c0_28, %c0_29], %103 {strides = array<i32>} : memref<1x8x16x128xbf16, #tpu.memory_space<vmem>>, vector<1x8x16x128xbf16>,
    return
  }
  func.func @transform_0(%arg0: i32, %arg1: i32) -> (i32, i32, i32, i32) {
    %c0_i32 = arith.constant 0 : i32
    %c0_i32_0 = arith.constant 0 : i32
    %c0_i32_1 = arith.constant 0 : i32
    return %arg0, %arg1, %c0_i32, %c0_i32_0 : i32, i32, i32, i32
  }
  func.func @transform_1(%arg0: i32, %arg1: i32) -> (i32, i32, i32, i32) {
    %c8_i32 = arith.constant 8 : i32
    %0 = arith.muli %arg1, %c8_i32 : i32
    %c1_i32 = arith.constant 1 : i32
    %1 = arith.subi %0, %c1_i32 : i32
    %c0_i32 = arith.constant 0 : i32
    %2 = arith.maxsi %1, %c0_i32 : i32
    %c0_i32_0 = arith.constant 0 : i32
    %c0_i32_1 = arith.constant 0 : i32
    %c0_i32_2 = arith.constant 0 : i32
    return %arg0, %2, %c0_i32_0, %c0_i32_1 : i32, i32, i32, i32
  }
  func.func @transform_2(%arg0: i32, %arg1: i32) -> (i32, i32, i32, i32) {
    %c1_i32 = arith.constant 1 : i32
    %0 = arith.addi %arg1, %c1_i32 : i32
    %c8_i32 = arith.constant 8 : i32
    %1 = arith.muli %0, %c8_i32 : i32
    %c15_i32 = arith.constant 15 : i32
    %2 = arith.minsi %1, %c15_i32 : i32
    %c0_i32 = arith.constant 0 : i32
    %c0_i32_0 = arith.constant 0 : i32
    %c0_i32_1 = arith.constant 0 : i32
    return %arg0, %2, %c0_i32, %c0_i32_0 : i32, i32, i32, i32
  }
  func.func @transform_3(%arg0: i32, %arg1: i32) -> (i32, i32) {
    %c0_i32 = arith.constant 0 : i32
    %c0_i32_0 = arith.constant 0 : i32
    %c0_i32_1 = arith.constant 0 : i32
    return %c0_i32, %c0_i32_0 : i32, i32
  }
  func.func @transform_4(%arg0: i32, %arg1: i32) -> (i32, i32) {
    %c0_i32 = arith.constant 0 : i32
    %c0_i32_0 = arith.constant 0 : i32
    %c0_i32_1 = arith.constant 0 : i32
    return %c0_i32, %c0_i32_0 : i32, i32
  }
  func.func @transform_5(%arg0: i32, %arg1: i32) -> (i32, i32) {
    %c0_i32 = arith.constant 0 : i32
    %c0_i32_0 = arith.constant 0 : i32
    %c0_i32_1 = arith.constant 0 : i32
    return %c0_i32, %c0_i32_0 : i32, i32
  }
  func.func @transform_6(%arg0: i32, %arg1: i32) -> (i32, i32) {
    %c0_i32 = arith.constant 0 : i32
    %c0_i32_0 = arith.constant 0 : i32
    %c0_i32_1 = arith.constant 0 : i32
    return %c0_i32, %c0_i32_0 : i32, i32
  }
  func.func @transform_7(%arg0: i32, %arg1: i32) -> (i32, i32, i32, i32) {
    %c0_i32 = arith.constant 0 : i32
    %c0_i32_0 = arith.constant 0 : i32
    %c0_i32_1 = arith.constant 0 : i32
    return %arg0, %arg1, %c0_i32, %c0_i32_0 : i32, i32, i32, i32
  }
}

</mosaic_0001>

<llo_original>
// kernel: _lambda_.1
$region0: #{_lambda_.1}
  #allocation0 [shape = 'u32[]', space=smem, size = 0x4, offset = 0x4, fixed_abs, tag = 'smem constant byte address 0x4 - core index']
  #allocation1 [shape = 'u32[144,128]{1,0:T(1,128)}', space=vmem, size = 0x12000, scoped, tag = 'internal scratch']
  %s0 = inlined_call_operand.vmem [shape: bf16[2,16,16,64], index: 0, kind: input, shape index: {}, may-alias: {0,1,2}]
  %s1 = inlined_call_operand.vmem [shape: bf16[2,16,16,64], index: 1, kind: input, shape index: {}, may-alias: {0,1,2}]
  %s2 = inlined_call_operand.vmem [shape: bf16[2,16,16,64], index: 2, kind: input, shape index: {}, may-alias: {0,1,2}]
  %s3 = inlined_call_operand.vmem [shape: f32[9,64], index: 3, kind: input, shape index: {}]
  %s4 = inlined_call_operand.vmem [shape: f32[1,64], index: 4, kind: input, shape index: {}]
  %s5 = inlined_call_operand.vmem [shape: bf16[64,128], index: 5, kind: input, shape index: {}]
  %s6 = inlined_call_operand.vmem [shape: f32[1,128], index: 6, kind: input, shape index: {}]
  %s7 = inlined_call_operand.vmem [shape: bf16[2,16,16,128], index: 7, kind: output, shape index: {}]
  %s8 = sld [smem:[#allocation0]]
  $region61: #{_lambda_.1} parent=0
    _
  %s10 = ssub.s32 1, %s8
  %s11 = scalar_select 0, %s10, %s8
  loop: start=0, step=1, limit=6
  $region2: #{_lambda_.1} parent=0 // loop_pre_header
    _
  $region3: #{_lambda_.1} parent=0 // loop_header
    %s13 = sphi 0, %s17
    %p14 = scmp.ge.s32.totalorder %s13, 6
    %s20 = sphi 0, %s32
    %s21 = sphi 0, %s28
    %s22 = sphi 0, %s20
    %s23 = sphi 0, %s21
    %s24 = sphi 0, %s22
    %s25 = sphi 0, %s23
    %s37 = sphi 0, %s39
    %s40 = sphi 0, %s37
    %s41 = sphi 0, %s40
    %s57 = sphi 0, %s41
    %s73 = sphi 0, %s75
    %s76 = sphi 0, %s73
    %s77 = sphi 0, %s76
    %s93 = sphi 0, %s77
    %s109 = sphi 0, %s111
    %s112 = sphi 0, %s109
    %s113 = sphi 0, %s112
    %s129 = sphi 0, %s113
    %s133 = sphi 0, %s133
    %s135 = sphi 0, %s133
    %s136 = sphi 0, %s135
    %s150 = sphi 0, %s136
    %s154 = sphi 0, %s154
    %s156 = sphi 0, %s154
    %s157 = sphi 0, %s156
    %s171 = sphi 0, %s157
    %s175 = sphi 0, %s175
    %s177 = sphi 0, %s175
    %s178 = sphi 0, %s177
    %s192 = sphi 0, %s178
    %s196 = sphi 0, %s196
    %s198 = sphi 0, %s196
    %s199 = sphi 0, %s198
    %s213 = sphi 0, %s199
    %s221 = sphi 0, %s223
    %s224 = sphi 0, %s221
    %s225 = sphi 0, %s224
    %s241 = sphi 0, %s225
  $region4: #{_lambda_.1} parent=0 // loop_header_branch
    %16 = sbr.rel (%p14) target = $region8
  $region5: #{_lambda_.1} parent=0 // loop_body
    %s18 = ssub.s32 %s13, 1
    %s19 = ssub.s32 %s13, 2
    %s26 = sadd.s32 1, %s21
    %p27 = scmp.ge.s32.totalorder %s26, 2
    %s28 = scalar_select %p27, 0, %s26
    %s29 = sadd.s32 1, %s20
    %s30 = scalar_select %p27, %s29, %s20
    %p31 = scmp.ge.s32.totalorder %s30, 2
    %s32 = scalar_select %p31, 0, %s30
    %s33 = ssub.s32 %s20, %s32
    %s34 = ssub.s32 %s21, %s28
    %s35 = sor.u32 %s33, %s34
    %p36 = scmp.eq.s32.totalorder %s35, 0
    %s38 = sadd.s32 %s37, 1
    %s39 = scalar_select %p36, %s37, %s38
    %p42 = pneg %p36
    %p43 = scmp.eq.s32.totalorder %s13, 3
    %p44 = por %p42, %p43
    %p45 = scmp.ne.s32.totalorder %s37, %s40
    %p46 = scmp.eq.s32.totalorder %s13, 0
    %p47 = por %p45, %p46
    %p48 = scmp.ne.s32.totalorder %s37, %s40
    %p49 = scmp.eq.s32.totalorder %s18, 3
    %p50 = por %p48, %p49
    %p51 = scmp.ne.s32.totalorder %s40, %s41
    %p52 = scmp.eq.s32.totalorder %s18, 0
    %p53 = por %p51, %p52
    %p54 = scmp.ne.s32.totalorder %s40, %s41
    %p55 = scmp.eq.s32.totalorder %s19, 3
    %p56 = por %p54, %p55
    %p58 = scmp.ne.s32.totalorder %s41, %s57
    %p59 = scmp.eq.s32.totalorder %s19, 0
    %p60 = por %p58, %p59
    %s61 = smul.u32 %s21, 8
    %s62 = ssub.s32 %s61, 1
    %p63 = scmp.gt.s32.totalorder %s62, 0
    %s64 = scalar_select %p63, %s62, 0
    %s65 = smul.u32 %s28, 8
    %s66 = ssub.s32 %s65, 1
    %p67 = scmp.gt.s32.totalorder %s66, 0
    %s68 = scalar_select %p67, %s66, 0
    %s69 = ssub.s32 %s20, %s32
    %s70 = ssub.s32 %s64, %s68
    %s71 = sor.u32 %s69, %s70
    %p72 = scmp.eq.s32.totalorder %s71, 0
    %s74 = sadd.s32 %s73, 1
    %s75 = scalar_select %p72, %s73, %s74
    %p78 = pneg %p72
    %p79 = scmp.eq.s32.totalorder %s13, 3
    %p80 = por %p78, %p79
    %p81 = scmp.ne.s32.totalorder %s73, %s76
    %p82 = scmp.eq.s32.totalorder %s13, 0
    %p83 = por %p81, %p82
    %p84 = scmp.ne.s32.totalorder %s73, %s76
    %p85 = scmp.eq.s32.totalorder %s18, 3
    %p86 = por %p84, %p85
    %p87 = scmp.ne.s32.totalorder %s76, %s77
    %p88 = scmp.eq.s32.totalorder %s18, 0
    %p89 = por %p87, %p88
    %p90 = scmp.ne.s32.totalorder %s76, %s77
    %p91 = scmp.eq.s32.totalorder %s19, 3
    %p92 = por %p90, %p91
    %p94 = scmp.ne.s32.totalorder %s77, %s93
    %p95 = scmp.eq.s32.totalorder %s19, 0
    %p96 = por %p94, %p95
    %s97 = sadd.s32 %s21, 1
    %s98 = smul.u32 %s97, 8
    %p99 = scmp.lt.s32.totalorder %s98, 15
    %s100 = scalar_select %p99, %s98, 15
    %s101 = sadd.s32 %s28, 1
    %s102 = smul.u32 %s101, 8
    %p103 = scmp.lt.s32.totalorder %s102, 15
    %s104 = scalar_select %p103, %s102, 15
    %s105 = ssub.s32 %s20, %s32
    %s106 = ssub.s32 %s100, %s104
    %s107 = sor.u32 %s105, %s106
    %p108 = scmp.eq.s32.totalorder %s107, 0
    %s110 = sadd.s32 %s109, 1
    %s111 = scalar_select %p108, %s109, %s110
    %p114 = pneg %p108
    %p115 = scmp.eq.s32.totalorder %s13, 3
    %p116 = por %p114, %p115
    %p117 = scmp.ne.s32.totalorder %s109, %s112
    %p118 = scmp.eq.s32.totalorder %s13, 0
    %p119 = por %p117, %p118
    %p120 = scmp.ne.s32.totalorder %s109, %s112
    %p121 = scmp.eq.s32.totalorder %s18, 3
    %p122 = por %p120, %p121
    %p123 = scmp.ne.s32.totalorder %s112, %s113
    %p124 = scmp.eq.s32.totalorder %s18, 0
    %p125 = por %p123, %p124
    %p126 = scmp.ne.s32.totalorder %s112, %s113
    %p127 = scmp.eq.s32.totalorder %s19, 3
    %p128 = por %p126, %p127
    %p130 = scmp.ne.s32.totalorder %s113, %s129
    %p131 = scmp.eq.s32.totalorder %s19, 0
    %p132 = por %p130, %p131
    %s134 = sadd.s32 %s133, 1
    %p137 = scmp.eq.s32.totalorder %s13, 3
    %p138 = scmp.ne.s32.totalorder %s133, %s135
    %p139 = scmp.eq.s32.totalorder %s13, 0
    %p140 = por %p138, %p139
    %p141 = scmp.ne.s32.totalorder %s133, %s135
    %p142 = scmp.eq.s32.totalorder %s18, 3
    %p143 = por %p141, %p142
    %p144 = scmp.ne.s32.totalorder %s135, %s136
    %p145 = scmp.eq.s32.totalorder %s18, 0
    %p146 = por %p144, %p145
    %p147 = scmp.ne.s32.totalorder %s135, %s136
    %p148 = scmp.eq.s32.totalorder %s19, 3
    %p149 = por %p147, %p148
    %p151 = scmp.ne.s32.totalorder %s136, %s150
    %p152 = scmp.eq.s32.totalorder %s19, 0
    %p153 = por %p151, %p152
    %s155 = sadd.s32 %s154, 1
    %p158 = scmp.eq.s32.totalorder %s13, 3
    %p159 = scmp.ne.s32.totalorder %s154, %s156
    %p160 = scmp.eq.s32.totalorder %s13, 0
    %p161 = por %p159, %p160
    %p162 = scmp.ne.s32.totalorder %s154, %s156
    %p163 = scmp.eq.s32.totalorder %s18, 3
    %p164 = por %p162, %p163
    %p165 = scmp.ne.s32.totalorder %s156, %s157
    %p166 = scmp.eq.s32.totalorder %s18, 0
    %p167 = por %p165, %p166
    %p168 = scmp.ne.s32.totalorder %s156, %s157
    %p169 = scmp.eq.s32.totalorder %s19, 3
    %p170 = por %p168, %p169
    %p172 = scmp.ne.s32.totalorder %s157, %s171
    %p173 = scmp.eq.s32.totalorder %s19, 0
    %p174 = por %p172, %p173
    %s176 = sadd.s32 %s175, 1
    %p179 = scmp.eq.s32.totalorder %s13, 3
    %p180 = scmp.ne.s32.totalorder %s175, %s177
    %p181 = scmp.eq.s32.totalorder %s13, 0
    %p182 = por %p180, %p181
    %p183 = scmp.ne.s32.totalorder %s175, %s177
    %p184 = scmp.eq.s32.totalorder %s18, 3
    %p185 = por %p183, %p184
    %p186 = scmp.ne.s32.totalorder %s177, %s178
    %p187 = scmp.eq.s32.totalorder %s18, 0
    %p188 = por %p186, %p187
    %p189 = scmp.ne.s32.totalorder %s177, %s178
    %p190 = scmp.eq.s32.totalorder %s19, 3
    %p191 = por %p189, %p190
    %p193 = scmp.ne.s32.totalorder %s178, %s192
    %p194 = scmp.eq.s32.totalorder %s19, 0
    %p195 = por %p193, %p194
    %s197 = sadd.s32 %s196, 1
    %p200 = scmp.eq.s32.totalorder %s13, 3
    %p201 = scmp.ne.s32.totalorder %s196, %s198
    %p202 = scmp.eq.s32.totalorder %s13, 0
    %p203 = por %p201, %p202
    %p204 = scmp.ne.s32.totalorder %s196, %s198
    %p205 = scmp.eq.s32.totalorder %s18, 3
    %p206 = por %p204, %p205
    %p207 = scmp.ne.s32.totalorder %s198, %s199
    %p208 = scmp.eq.s32.totalorder %s18, 0
    %p209 = por %p207, %p208
    %p210 = scmp.ne.s32.totalorder %s198, %s199
    %p211 = scmp.eq.s32.totalorder %s19, 3
    %p212 = por %p210, %p211
    %p214 = scmp.ne.s32.totalorder %s199, %s213
    %p215 = scmp.eq.s32.totalorder %s19, 0
    %p216 = por %p214, %p215
    %s217 = ssub.s32 %s20, %s32
    %s218 = ssub.s32 %s21, %s28
    %s219 = sor.u32 %s217, %s218
    %p220 = scmp.eq.s32.totalorder %s219, 0
    %s222 = sadd.s32 %s221, 1
    %s223 = scalar_select %p220, %s221, %s222
    %p226 = pneg %p220
    %p227 = scmp.eq.s32.totalorder %s13, 3
    %p228 = por %p226, %p227
    %p229 = scmp.ne.s32.totalorder %s221, %s224
    %p230 = scmp.eq.s32.totalorder %s13, 0
    %p231 = por %p229, %p230
    %p232 = scmp.ne.s32.totalorder %s221, %s224
    %p233 = scmp.eq.s32.totalorder %s18, 3
    %p234 = por %p232, %p233
    %p235 = scmp.ne.s32.totalorder %s224, %s225
    %p236 = scmp.eq.s32.totalorder %s18, 0
    %p237 = por %p235, %p236
    %p238 = scmp.ne.s32.totalorder %s224, %s225
    %p239 = scmp.eq.s32.totalorder %s19, 3
    %p240 = por %p238, %p239
    %p242 = scmp.ne.s32.totalorder %s225, %s241
    %p243 = scmp.eq.s32.totalorder %s19, 0
    %p244 = por %p242, %p243
    %p245 = scmp.le.s32.totalorder 1, %s13
    %p246 = scmp.lt.s32.totalorder %s13, 5
    %p247 = pnand %p245, %p246
    %p248 = pneg %p247
    // Predicated region
    $region9: #{_lambda_.1} parent=5 // pred_check
      _
    $region10: #{_lambda_.1} parent=5 // pred_check_branch
      %250 = sbr.rel (%p247) target = $region12
    $region11: #{_lambda_.1} parent=5 // pred_region
      %s251 = ssub.s32 %s13, 1
      // Predicated region
      $region13: #{_lambda_.1} parent=11 // pred_check
        %p252 = pneg %p146
      $region14: #{_lambda_.1} parent=11 // pred_check_branch
        %254 = sbr.rel (%p252) target = $region16
      $region15: #{_lambda_.1} parent=11 // pred_region
        _
      $region16: #{_lambda_.1} parent=11 // pred_fallthru
        _
      // Predicated region
      $region17: #{_lambda_.1} parent=11 // pred_check
        %p255 = pneg %p167
      $region18: #{_lambda_.1} parent=11 // pred_check_branch
        %257 = sbr.rel (%p255) target = $region20
      $region19: #{_lambda_.1} parent=11 // pred_region
        _
      $region20: #{_lambda_.1} parent=11 // pred_fallthru
        _
      // Predicated region
      $region21: #{_lambda_.1} parent=11 // pred_check
        %p258 = pneg %p188
      $region22: #{_lambda_.1} parent=11 // pred_check_branch
        %260 = sbr.rel (%p258) target = $region24
      $region23: #{_lambda_.1} parent=11 // pred_region
        _
      $region24: #{_lambda_.1} parent=11 // pred_fallthru
        _
      // Predicated region
      $region25: #{_lambda_.1} parent=11 // pred_check
        %p261 = pneg %p209
      $region26: #{_lambda_.1} parent=11 // pred_check_branch
        %263 = sbr.rel (%p261) target = $region28
      $region27: #{_lambda_.1} parent=11 // pred_region
        _
      $region28: #{_lambda_.1} parent=11 // pred_fallthru
        _
    $region12: #{_lambda_.1} parent=5 // pred_fallthru
      _
    %p264 = scmp.lt.s32.totalorder %s13, 4
    // Predicated region
    $region29: #{_lambda_.1} parent=5 // pred_check
      %p265 = pneg %p264
    $region30: #{_lambda_.1} parent=5 // pred_check_branch
      %267 = sbr.rel (%p265) target = $region32
    $region31: #{_lambda_.1} parent=5 // pred_region
      // Predicated region
      $region33: #{_lambda_.1} parent=31 // pred_check
        %p268 = pneg %p47
      $region34: #{_lambda_.1} parent=31 // pred_check_branch
        %270 = sbr.rel (%p268) target = $region36
      $region35: #{_lambda_.1} parent=31 // pred_region
        %s271 = smul.u32 8, %s21
        %p272 = scmp.lt.s32.totalorder %s20, 1
        %s273 = scalar_select %p272, %s20, 1
        %p274 = scmp.lt.s32.totalorder %s271, 15
        %s275 = scalar_select %p274, %s271, 15
        %s276 = smul.addr %s275, 2
        %s277 = smul.addr %s273, 32
        %s278 = sadd.s32 %s276, %s277
        %s279 = smul.addr %s278, 4
        %s280 = scalar_lea.vmem %s0, %s279
        %s281 = smul.u32 8, %s21
      $region36: #{_lambda_.1} parent=31 // pred_fallthru
        _
      // Predicated region
      $region37: #{_lambda_.1} parent=31 // pred_check
        %p282 = pneg %p83
      $region38: #{_lambda_.1} parent=31 // pred_check_branch
        %284 = sbr.rel (%p282) target = $region40
      $region39: #{_lambda_.1} parent=31 // pred_region
        %s285 = smul.u32 %s21, 8
        %s286 = ssub.s32 %s285, 1
        %p287 = scmp.gt.s32.totalorder %s286, 0
        %s288 = scalar_select %p287, %s286, 0
        %p289 = scmp.lt.s32.totalorder %s20, 1
        %s290 = scalar_select %p289, %s20, 1
        %p291 = scmp.lt.s32.totalorder %s288, 15
        %s292 = scalar_select %p291, %s288, 15
        %s293 = smul.addr %s292, 2
        %s294 = smul.addr %s290, 32
        %s295 = sadd.s32 %s293, %s294
        %s296 = smul.addr %s295, 4
        %s297 = scalar_lea.vmem %s1, %s296
        %s298 = smul.u32 %s21, 8
        %s299 = ssub.s32 %s298, 1
        %p300 = scmp.gt.s32.totalorder %s299, 0
        %s301 = scalar_select %p300, %s299, 0
      $region40: #{_lambda_.1} parent=31 // pred_fallthru
        _
      // Predicated region
      $region41: #{_lambda_.1} parent=31 // pred_check
        %p302 = pneg %p119
      $region42: #{_lambda_.1} parent=31 // pred_check_branch
        %304 = sbr.rel (%p302) target = $region44
      $region43: #{_lambda_.1} parent=31 // pred_region
        %s305 = sadd.s32 %s21, 1
        %s306 = smul.u32 %s305, 8
        %p307 = scmp.lt.s32.totalorder %s306, 15
        %s308 = scalar_select %p307, %s306, 15
        %p309 = scmp.lt.s32.totalorder %s20, 1
        %s310 = scalar_select %p309, %s20, 1
        %p311 = scmp.lt.s32.totalorder %s308, 15
        %s312 = scalar_select %p311, %s308, 15
        %s313 = smul.addr %s312, 2
        %s314 = smul.addr %s310, 32
        %s315 = sadd.s32 %s313, %s314
        %s316 = smul.addr %s315, 4
        %s317 = scalar_lea.vmem %s2, %s316
        %s318 = sadd.s32 %s21, 1
        %s319 = smul.u32 %s318, 8
        %p320 = scmp.lt.s32.totalorder %s319, 15
        %s321 = scalar_select %p320, %s319, 15
      $region44: #{_lambda_.1} parent=31 // pred_fallthru
        _
    $region32: #{_lambda_.1} parent=5 // pred_fallthru
      _
    %p322 = scmp.le.s32.totalorder 1, %s13
    %p323 = scmp.lt.s32.totalorder %s13, 5
    %p324 = pnand %p322, %p323
    %p325 = pneg %p324
    // Predicated region
    $region45: #{_lambda_.1} parent=5 // pred_check
      _
    $region46: #{_lambda_.1} parent=5 // pred_check_branch
      %327 = sbr.rel (%p324) target = $region48
    $region47: #{_lambda_.1} parent=5 // pred_region
      %s328 = ssub.s32 %s13, 1
      %s329 = smul.u32 8, %s23
      %p330 = scmp.lt.s32.totalorder %s22, 1
      %s331 = scalar_select %p330, %s22, 1
      %p332 = scmp.lt.s32.totalorder %s329, 15
      %s333 = scalar_select %p332, %s329, 15
      %s334 = smul.addr %s333, 2
      %s335 = smul.addr %s331, 32
      %s336 = sadd.s32 %s334, %s335
      %s337 = smul.addr %s336, 4
      %s338 = scalar_lea.vmem %s0, %s337
      %p339 = pneg %p53
      %p340 = pneg %p50
      %s341 = smul.u32 %s23, 8
      %s342 = ssub.s32 %s341, 1
      %p343 = scmp.gt.s32.totalorder %s342, 0
      %s344 = scalar_select %p343, %s342, 0
      %p345 = scmp.lt.s32.totalorder %s22, 1
      %s346 = scalar_select %p345, %s22, 1
      %p347 = scmp.lt.s32.totalorder %s344, 15
      %s348 = scalar_select %p347, %s344, 15
      %s349 = smul.addr %s348, 2
      %s350 = smul.addr %s346, 32
      %s351 = sadd.s32 %s349, %s350
      %s352 = smul.addr %s351, 4
      %s353 = scalar_lea.vmem %s1, %s352
      %p354 = pneg %p89
      %p355 = pneg %p86
      %s356 = sadd.s32 %s23, 1
      %s357 = smul.u32 %s356, 8
      %p358 = scmp.lt.s32.totalorder %s357, 15
      %s359 = scalar_select %p358, %s357, 15
      %p360 = scmp.lt.s32.totalorder %s22, 1
      %s361 = scalar_select %p360, %s22, 1
      %p362 = scmp.lt.s32.totalorder %s359, 15
      %s363 = scalar_select %p362, %s359, 15
      %s364 = smul.addr %s363, 2
      %s365 = smul.addr %s361, 32
      %s366 = sadd.s32 %s364, %s365
      %s367 = smul.addr %s366, 4
      %s368 = scalar_lea.vmem %s2, %s367
      %p369 = pneg %p125
      %p370 = pneg %p122
      %p371 = pneg %p146
      %p372 = pneg %p143
      %p373 = pneg %p167
      %p374 = pneg %p164
      %p375 = pneg %p188
      %p376 = pneg %p185
      %p377 = pneg %p209
      %p378 = pneg %p206
      %p379 = pneg %p237
      %p380 = pneg %p234
      %s381 = smul.u32 8, %s23
      %p382 = scmp.lt.s32.totalorder %s22, 1
      %s383 = scalar_select %p382, %s22, 1
      %p384 = scmp.lt.s32.totalorder %s381, 15
      %s385 = scalar_select %p384, %s381, 15
      %s386 = smul.addr %s385, 2
      %s387 = smul.addr %s383, 32
      %s388 = sadd.s32 %s386, %s387
      %s389 = smul.addr %s388, 4
      %s390 = scalar_lea.vmem %s7, %s389
      %s391 = smul.u32 8, %s23
      %p392 = scmp.lt.s32.totalorder %s22, 1
      %s393 = scalar_select %p392, %s22, 1
      %p394 = scmp.lt.s32.totalorder %s391, 15
      %s395 = scalar_select %p394, %s391, 15
      %s396 = smul.addr %s395, 2
      %s397 = smul.addr %s393, 32
      %s398 = sadd.s32 %s396, %s397
      %s399 = smul.addr %s398, 4
      %s400 = scalar_lea.vmem %s0, %s399
      %s401 = smul.u32 8, %s23
      %s402 = smul.u32 %s23, 8
      %s403 = ssub.s32 %s402, 1
      %p404 = scmp.gt.s32.totalorder %s403, 0
      %s405 = scalar_select %p404, %s403, 0
      %p406 = scmp.lt.s32.totalorder %s22, 1
      %s407 = scalar_select %p406, %s22, 1
      %p408 = scmp.lt.s32.totalorder %s405, 15
      %s409 = scalar_select %p408, %s405, 15
      %s410 = smul.addr %s409, 2
      %s411 = smul.addr %s407, 32
      %s412 = sadd.s32 %s410, %s411
      %s413 = smul.addr %s412, 4
      %s414 = scalar_lea.vmem %s1, %s413
      %s415 = smul.u32 %s23, 8
      %s416 = ssub.s32 %s415, 1
      %p417 = scmp.gt.s32.totalorder %s416, 0
      %s418 = scalar_select %p417, %s416, 0
      %s419 = sadd.s32 %s23, 1
      %s420 = smul.u32 %s419, 8
      %p421 = scmp.lt.s32.totalorder %s420, 15
      %s422 = scalar_select %p421, %s420, 15
      %p423 = scmp.lt.s32.totalorder %s22, 1
      %s424 = scalar_select %p423, %s22, 1
      %p425 = scmp.lt.s32.totalorder %s422, 15
      %s426 = scalar_select %p425, %s422, 15
      %s427 = smul.addr %s426, 2
      %s428 = smul.addr %s424, 32
      %s429 = sadd.s32 %s427, %s428
      %s430 = smul.addr %s429, 4
      %s431 = scalar_lea.vmem %s2, %s430
      %s432 = sadd.s32 %s23, 1
      %s433 = smul.u32 %s432, 8
      %p434 = scmp.lt.s32.totalorder %s433, 15
      %s435 = scalar_select %p434, %s433, 15
      %s436 = smul.u32 8, %s23
      %p437 = scmp.lt.s32.totalorder %s22, 1
      %s438 = scalar_select %p437, %s22, 1
      %p439 = scmp.lt.s32.totalorder %s436, 15
      %s440 = scalar_select %p439, %s436, 15
      %s441 = smul.addr %s440, 2
      %s442 = smul.addr %s438, 32
      %s443 = sadd.s32 %s441, %s442
      %s444 = smul.addr %s443, 4
      %s445 = scalar_lea.vmem %s7, %s444
      %s446 = smul.u32 8, %s23
      %v448 = vld [vmem:[%s400] sm:$0xf]
      %v449 = vld [vmem:[%s400 + $0x4] sm:$0xf]
      %v450 = vld [vmem:[%s400 + $0x8] sm:$0xf]
      %v451 = vld [vmem:[%s400 + $0xc] sm:$0xf]
      %v452 = vld [vmem:[%s400 + $0x10] sm:$0xf]
      %v453 = vld [vmem:[%s400 + $0x14] sm:$0xf]
      %v454 = vld [vmem:[%s400 + $0x18] sm:$0xf]
      %v455 = vld [vmem:[%s400 + $0x1c] sm:$0xf]
      %v456 = vld [vmem:[%s400 + $0x20] sm:$0xf]
      %v457 = vld [vmem:[%s400 + $0x24] sm:$0xf]
      %v458 = vld [vmem:[%s400 + $0x28] sm:$0xf]
      %v459 = vld [vmem:[%s400 + $0x2c] sm:$0xf]
      %v460 = vld [vmem:[%s400 + $0x30] sm:$0xf]
      %v461 = vld [vmem:[%s400 + $0x34] sm:$0xf]
      %v462 = vld [vmem:[%s400 + $0x38] sm:$0xf]
      %v463 = vld [vmem:[%s400 + $0x3c] sm:$0xf]
      %v464 = vunpack.c.l.bf16 %v448
      %v465 = vunpack.c.l.bf16 %v449
      %v466 = vunpack.c.l.bf16 %v450
      %v467 = vunpack.c.l.bf16 %v451
      %v468 = vunpack.c.l.bf16 %v452
      %v469 = vunpack.c.l.bf16 %v453
      %v470 = vunpack.c.l.bf16 %v454
      %v471 = vunpack.c.l.bf16 %v455
      %v472 = vunpack.c.l.bf16 %v456
      %v473 = vunpack.c.l.bf16 %v457
      %v474 = vunpack.c.l.bf16 %v458
      %v475 = vunpack.c.l.bf16 %v459
      %v476 = vunpack.c.l.bf16 %v460
      %v477 = vunpack.c.l.bf16 %v461
      %v478 = vunpack.c.l.bf16 %v462
      %v479 = vunpack.c.l.bf16 %v463
      %p480 = scmp.gt.s32.totalorder %s23, 0
      %v481 = vld [vmem:[%s414] sm:$0xf]
      %v482 = vld [vmem:[%s414 + $0x4] sm:$0xf]
      %v483 = vunpack.c.l.bf16 %v481
      %v484 = vunpack.c.l.bf16 %v482
      %s485 = scalar_select %p480, 1, 0
      %v486 = vstv %s485
      %vm487 = vcmp.eq.s32.totalorder %v486, 1
      %v488 = vsel %vm487, %v483, 0.0
      %v489 = vsel %vm487, %v484, 0.0
      %p490 = scmp.lt.s32.totalorder %s23, 1
      %v491 = vld [vmem:[%s431] sm:$0xf]
      %v492 = vld [vmem:[%s431 + $0x4] sm:$0xf]
      %v493 = vunpack.c.l.bf16 %v491
      %v494 = vunpack.c.l.bf16 %v492
      %s495 = scalar_select %p490, 1, 0
      %v496 = vstv %s495
      %vm497 = vcmp.eq.s32.totalorder %v496, 1
      %v498 = vsel %vm497, %v493, 0.0
      %v499 = vsel %vm497, %v494, 0.0
      %v500 = vlaneseq
      %v501 = vshrl.u32 %v500, 7
      %v502 = vadd.s32 %v501, 8
      %vm503 = vcmp.eq.s32.totalorder %v501, 0
      %vm504 = vcmp.eq.s32.totalorder %v502, 0
      %v505 = vrot.slane %v488, 7
      %v506 = vrot.slane %v489, 7
      %v507 = vrot.slane %v464, 7
      %v508 = vrot.slane %v465, 7
      %v509 = vrot.slane %v466, 7
      %v510 = vrot.slane %v467, 7
      %v511 = vrot.slane %v468, 7
      %v512 = vrot.slane %v469, 7
      %v513 = vrot.slane %v470, 7
      %v514 = vrot.slane %v471, 7
      %v515 = vrot.slane %v472, 7
      %v516 = vrot.slane %v473, 7
      %v517 = vrot.slane %v474, 7
      %v518 = vrot.slane %v475, 7
      %v519 = vrot.slane %v476, 7
      %v520 = vrot.slane %v477, 7
      %v521 = vrot.slane %v478, 7
      %v522 = vrot.slane %v479, 7
      %v523 = vrot.slane %v498, 7
      %v524 = vrot.slane %v499, 7
      %vm525 = vcmp.lt.s32.totalorder %v501, 1
      %v526 = vsel %vm525, %v523, %v524
      %v527 = vsel %vm525, %v522, %v523
      %v528 = vsel %vm525, %v521, %v522
      %v529 = vsel %vm525, %v520, %v521
      %v530 = vsel %vm525, %v519, %v520
      %v531 = vsel %vm525, %v518, %v519
      %v532 = vsel %vm525, %v517, %v518
      %v533 = vsel %vm525, %v516, %v517
      %v534 = vsel %vm525, %v515, %v516
      %v535 = vsel %vm525, %v514, %v515
      %v536 = vsel %vm525, %v513, %v514
      %v537 = vsel %vm525, %v512, %v513
      %v538 = vsel %vm525, %v511, %v512
      %v539 = vsel %vm525, %v510, %v511
      %v540 = vsel %vm525, %v509, %v510
      %v541 = vsel %vm525, %v508, %v509
      %v542 = vsel %vm525, %v507, %v508
      %v543 = vsel %vm525, %v506, %v507
      %v544 = vsel %vm525, %v505, %v506
      %v545 = vsel %vm525, %v524, %v505
      %v546 = vsel %vm503, 0.0, %v545
      %v547 = vsel %vm504, 0.0, %v544
      %v548 = vsel %vm503, 0.0, %v543
      %v549 = vsel %vm504, 0.0, %v542
      %v550 = vsel %vm503, 0.0, %v541
      %v551 = vsel %vm504, 0.0, %v540
      %v552 = vsel %vm503, 0.0, %v539
      %v553 = vsel %vm504, 0.0, %v538
      %v554 = vsel %vm503, 0.0, %v537
      %v555 = vsel %vm504, 0.0, %v536
      %v556 = vsel %vm503, 0.0, %v535
      %v557 = vsel %vm504, 0.0, %v534
      %v558 = vsel %vm503, 0.0, %v533
      %v559 = vsel %vm504, 0.0, %v532
      %v560 = vsel %vm503, 0.0, %v531
      %v561 = vsel %vm504, 0.0, %v530
      %v562 = vsel %vm503, 0.0, %v529
      %v563 = vsel %vm504, 0.0, %v528
      %v564 = vsel %vm503, 0.0, %v527
      %v565 = vsel %vm504, 0.0, %v526
      %vm566 = vcmp.eq.s32.totalorder %v501, 15
      %vm567 = vcmp.eq.s32.totalorder %v502, 15
      %v568 = vrot.slane %v488, 1
      %v569 = vrot.slane %v489, 1
      %v570 = vrot.slane %v464, 1
      %v571 = vrot.slane %v465, 1
      %v572 = vrot.slane %v466, 1
      %v573 = vrot.slane %v467, 1
      %v574 = vrot.slane %v468, 1
      %v575 = vrot.slane %v469, 1
      %v576 = vrot.slane %v470, 1
      %v577 = vrot.slane %v471, 1
      %v578 = vrot.slane %v472, 1
      %v579 = vrot.slane %v473, 1
      %v580 = vrot.slane %v474, 1
      %v581 = vrot.slane %v475, 1
      %v582 = vrot.slane %v476, 1
      %v583 = vrot.slane %v477, 1
      %v584 = vrot.slane %v478, 1
      %v585 = vrot.slane %v479, 1
      %v586 = vrot.slane %v498, 1
      %v587 = vrot.slane %v499, 1
      %vm588 = vcmp.lt.s32.totalorder %v501, 7
      %v589 = vsel %vm588, %v586, %v587
      %v590 = vsel %vm588, %v585, %v586
      %v591 = vsel %vm588, %v584, %v585
      %v592 = vsel %vm588, %v583, %v584
      %v593 = vsel %vm588, %v582, %v583
      %v594 = vsel %vm588, %v581, %v582
      %v595 = vsel %vm588, %v580, %v581
      %v596 = vsel %vm588, %v579, %v580
      %v597 = vsel %vm588, %v578, %v579
      %v598 = vsel %vm588, %v577, %v578
      %v599 = vsel %vm588, %v576, %v577
      %v600 = vsel %vm588, %v575, %v576
      %v601 = vsel %vm588, %v574, %v575
      %v602 = vsel %vm588, %v573, %v574
      %v603 = vsel %vm588, %v572, %v573
      %v604 = vsel %vm588, %v571, %v572
      %v605 = vsel %vm588, %v570, %v571
      %v606 = vsel %vm588, %v569, %v570
      %v607 = vsel %vm588, %v568, %v569
      %v608 = vsel %vm588, %v587, %v568
      %v609 = vsel %vm566, 0.0, %v607
      %v610 = vsel %vm567, 0.0, %v606
      %v611 = vsel %vm566, 0.0, %v605
      %v612 = vsel %vm567, 0.0, %v604
      %v613 = vsel %vm566, 0.0, %v603
      %v614 = vsel %vm567, 0.0, %v602
      %v615 = vsel %vm566, 0.0, %v601
      %v616 = vsel %vm567, 0.0, %v600
      %v617 = vsel %vm566, 0.0, %v599
      %v618 = vsel %vm567, 0.0, %v598
      %v619 = vsel %vm566, 0.0, %v597
      %v620 = vsel %vm567, 0.0, %v596
      %v621 = vsel %vm566, 0.0, %v595
      %v622 = vsel %vm567, 0.0, %v594
      %v623 = vsel %vm566, 0.0, %v593
      %v624 = vsel %vm567, 0.0, %v592
      %v625 = vsel %vm566, 0.0, %v591
      %v626 = vsel %vm567, 0.0, %v590
      %v627 = vsel %vm566, 0.0, %v589
      %v628 = vsel %vm567, 0.0, %v608
      %v629 = vld [vmem:[%s3] sm:$0xff]
      %v630 = vld [vmem:[%s3 + $0x8] sm:$0x1]
      %v631 = vlaneseq
      %v632 = vshrl.u32 %v631, 7
      %v633 = vsub.s32 0, %v632
      %v634 = vrot.slane %v629, %v633
      %v635 = vmul.f32 %v546, %v634
      %v636 = vmul.f32 %v547, %v634
      %v637 = vmul.f32 %v548, %v634
      %v638 = vmul.f32 %v549, %v634
      %v639 = vmul.f32 %v550, %v634
      %v640 = vmul.f32 %v551, %v634
      %v641 = vmul.f32 %v552, %v634
      %v642 = vmul.f32 %v553, %v634
      %v643 = vmul.f32 %v554, %v634
      %v644 = vmul.f32 %v555, %v634
      %v645 = vmul.f32 %v556, %v634
      %v646 = vmul.f32 %v557, %v634
      %v647 = vmul.f32 %v558, %v634
      %v648 = vmul.f32 %v559, %v634
      %v649 = vmul.f32 %v560, %v634
      %v650 = vmul.f32 %v561, %v634
      %v651 = vadd.f32 %v635, 0.0
      %v652 = vadd.f32 %v636, 0.0
      %v653 = vadd.f32 %v637, 0.0
      %v654 = vadd.f32 %v638, 0.0
      %v655 = vadd.f32 %v639, 0.0
      %v656 = vadd.f32 %v640, 0.0
      %v657 = vadd.f32 %v641, 0.0
      %v658 = vadd.f32 %v642, 0.0
      %v659 = vadd.f32 %v643, 0.0
      %v660 = vadd.f32 %v644, 0.0
      %v661 = vadd.f32 %v645, 0.0
      %v662 = vadd.f32 %v646, 0.0
      %v663 = vadd.f32 %v647, 0.0
      %v664 = vadd.f32 %v648, 0.0
      %v665 = vadd.f32 %v649, 0.0
      %v666 = vadd.f32 %v650, 0.0
      %v667 = vlaneseq
      %v668 = vshrl.u32 %v667, 7
      %v669 = vsub.s32 1, %v668
      %v670 = vrot.slane %v629, %v669
      %v671 = vmul.f32 %v488, %v670
      %v672 = vmul.f32 %v489, %v670
      %v673 = vmul.f32 %v464, %v670
      %v674 = vmul.f32 %v465, %v670
      %v675 = vmul.f32 %v466, %v670
      %v676 = vmul.f32 %v467, %v670
      %v677 = vmul.f32 %v468, %v670
      %v678 = vmul.f32 %v469, %v670
      %v679 = vmul.f32 %v470, %v670
      %v680 = vmul.f32 %v471, %v670
      %v681 = vmul.f32 %v472, %v670
      %v682 = vmul.f32 %v473, %v670
      %v683 = vmul.f32 %v474, %v670
      %v684 = vmul.f32 %v475, %v670
      %v685 = vmul.f32 %v476, %v670
      %v686 = vmul.f32 %v477, %v670
      %v687 = vadd.f32 %v651, %v671
      %v688 = vadd.f32 %v652, %v672
      %v689 = vadd.f32 %v653, %v673
      %v690 = vadd.f32 %v654, %v674
      %v691 = vadd.f32 %v655, %v675
      %v692 = vadd.f32 %v656, %v676
      %v693 = vadd.f32 %v657, %v677
      %v694 = vadd.f32 %v658, %v678
      %v695 = vadd.f32 %v659, %v679
      %v696 = vadd.f32 %v660, %v680
      %v697 = vadd.f32 %v661, %v681
      %v698 = vadd.f32 %v662, %v682
      %v699 = vadd.f32 %v663, %v683
      %v700 = vadd.f32 %v664, %v684
      %v701 = vadd.f32 %v665, %v685
      %v702 = vadd.f32 %v666, %v686
      %v703 = vlaneseq
      %v704 = vshrl.u32 %v703, 7
      %v705 = vsub.s32 2, %v704
      %v706 = vrot.slane %v629, %v705
      %v707 = vmul.f32 %v609, %v706
      %v708 = vmul.f32 %v610, %v706
      %v709 = vmul.f32 %v611, %v706
      %v710 = vmul.f32 %v612, %v706
      %v711 = vmul.f32 %v613, %v706
      %v712 = vmul.f32 %v614, %v706
      %v713 = vmul.f32 %v615, %v706
      %v714 = vmul.f32 %v616, %v706
      %v715 = vmul.f32 %v617, %v706
      %v716 = vmul.f32 %v618, %v706
      %v717 = vmul.f32 %v619, %v706
      %v718 = vmul.f32 %v620, %v706
      %v719 = vmul.f32 %v621, %v706
      %v720 = vmul.f32 %v622, %v706
      %v721 = vmul.f32 %v623, %v706
      %v722 = vmul.f32 %v624, %v706
      %v723 = vadd.f32 %v687, %v707
      %v724 = vadd.f32 %v688, %v708
      %v725 = vadd.f32 %v689, %v709
      %v726 = vadd.f32 %v690, %v710
      %v727 = vadd.f32 %v691, %v711
      %v728 = vadd.f32 %v692, %v712
      %v729 = vadd.f32 %v693, %v713
      %v730 = vadd.f32 %v694, %v714
      %v731 = vadd.f32 %v695, %v715
      %v732 = vadd.f32 %v696, %v716
      %v733 = vadd.f32 %v697, %v717
      %v734 = vadd.f32 %v698, %v718
      %v735 = vadd.f32 %v699, %v719
      %v736 = vadd.f32 %v700, %v720
      %v737 = vadd.f32 %v701, %v721
      %v738 = vadd.f32 %v702, %v722
      %v739 = vlaneseq
      %v740 = vshrl.u32 %v739, 7
      %v741 = vsub.s32 3, %v740
      %v742 = vrot.slane %v629, %v741
      %v743 = vmul.f32 %v548, %v742
      %v744 = vmul.f32 %v549, %v742
      %v745 = vmul.f32 %v550, %v742
      %v746 = vmul.f32 %v551, %v742
      %v747 = vmul.f32 %v552, %v742
      %v748 = vmul.f32 %v553, %v742
      %v749 = vmul.f32 %v554, %v742
      %v750 = vmul.f32 %v555, %v742
      %v751 = vmul.f32 %v556, %v742
      %v752 = vmul.f32 %v557, %v742
      %v753 = vmul.f32 %v558, %v742
      %v754 = vmul.f32 %v559, %v742
      %v755 = vmul.f32 %v560, %v742
      %v756 = vmul.f32 %v561, %v742
      %v757 = vmul.f32 %v562, %v742
      %v758 = vmul.f32 %v563, %v742
      %v759 = vadd.f32 %v723, %v743
      %v760 = vadd.f32 %v724, %v744
      %v761 = vadd.f32 %v725, %v745
      %v762 = vadd.f32 %v726, %v746
      %v763 = vadd.f32 %v727, %v747
      %v764 = vadd.f32 %v728, %v748
      %v765 = vadd.f32 %v729, %v749
      %v766 = vadd.f32 %v730, %v750
      %v767 = vadd.f32 %v731, %v751
      %v768 = vadd.f32 %v732, %v752
      %v769 = vadd.f32 %v733, %v753
      %v770 = vadd.f32 %v734, %v754
      %v771 = vadd.f32 %v735, %v755
      %v772 = vadd.f32 %v736, %v756
      %v773 = vadd.f32 %v737, %v757
      %v774 = vadd.f32 %v738, %v758
      %v775 = vlaneseq
      %v776 = vshrl.u32 %v775, 7
      %v777 = vsub.s32 4, %v776
      %v778 = vrot.slane %v629, %v777
      %v779 = vmul.f32 %v464, %v778
      %v780 = vmul.f32 %v465, %v778
      %v781 = vmul.f32 %v466, %v778
      %v782 = vmul.f32 %v467, %v778
      %v783 = vmul.f32 %v468, %v778
      %v784 = vmul.f32 %v469, %v778
      %v785 = vmul.f32 %v470, %v778
      %v786 = vmul.f32 %v471, %v778
      %v787 = vmul.f32 %v472, %v778
      %v788 = vmul.f32 %v473, %v778
      %v789 = vmul.f32 %v474, %v778
      %v790 = vmul.f32 %v475, %v778
      %v791 = vmul.f32 %v476, %v778
      %v792 = vmul.f32 %v477, %v778
      %v793 = vmul.f32 %v478, %v778
      %v794 = vmul.f32 %v479, %v778
      %v795 = vadd.f32 %v759, %v779
      %v796 = vadd.f32 %v760, %v780
      %v797 = vadd.f32 %v761, %v781
      %v798 = vadd.f32 %v762, %v782
      %v799 = vadd.f32 %v763, %v783
      %v800 = vadd.f32 %v764, %v784
      %v801 = vadd.f32 %v765, %v785
      %v802 = vadd.f32 %v766, %v786
      %v803 = vadd.f32 %v767, %v787
      %v804 = vadd.f32 %v768, %v788
      %v805 = vadd.f32 %v769, %v789
      %v806 = vadd.f32 %v770, %v790
      %v807 = vadd.f32 %v771, %v791
      %v808 = vadd.f32 %v772, %v792
      %v809 = vadd.f32 %v773, %v793
      %v810 = vadd.f32 %v774, %v794
      %v811 = vlaneseq
      %v812 = vshrl.u32 %v811, 7
      %v813 = vsub.s32 5, %v812
      %v814 = vrot.slane %v629, %v813
      %v815 = vmul.f32 %v611, %v814
      %v816 = vmul.f32 %v612, %v814
      %v817 = vmul.f32 %v613, %v814
      %v818 = vmul.f32 %v614, %v814
      %v819 = vmul.f32 %v615, %v814
      %v820 = vmul.f32 %v616, %v814
      %v821 = vmul.f32 %v617, %v814
      %v822 = vmul.f32 %v618, %v814
      %v823 = vmul.f32 %v619, %v814
      %v824 = vmul.f32 %v620, %v814
      %v825 = vmul.f32 %v621, %v814
      %v826 = vmul.f32 %v622, %v814
      %v827 = vmul.f32 %v623, %v814
      %v828 = vmul.f32 %v624, %v814
      %v829 = vmul.f32 %v625, %v814
      %v830 = vmul.f32 %v626, %v814
      %v831 = vadd.f32 %v795, %v815
      %v832 = vadd.f32 %v796, %v816
      %v833 = vadd.f32 %v797, %v817
      %v834 = vadd.f32 %v798, %v818
      %v835 = vadd.f32 %v799, %v819
      %v836 = vadd.f32 %v800, %v820
      %v837 = vadd.f32 %v801, %v821
      %v838 = vadd.f32 %v802, %v822
      %v839 = vadd.f32 %v803, %v823
      %v840 = vadd.f32 %v804, %v824
      %v841 = vadd.f32 %v805, %v825
      %v842 = vadd.f32 %v806, %v826
      %v843 = vadd.f32 %v807, %v827
      %v844 = vadd.f32 %v808, %v828
      %v845 = vadd.f32 %v809, %v829
      %v846 = vadd.f32 %v810, %v830
      %v847 = vlaneseq
      %v848 = vshrl.u32 %v847, 7
      %v849 = vsub.s32 6, %v848
      %v850 = vrot.slane %v629, %v849
      %v851 = vmul.f32 %v550, %v850
      %v852 = vmul.f32 %v551, %v850
      %v853 = vmul.f32 %v552, %v850
      %v854 = vmul.f32 %v553, %v850
      %v855 = vmul.f32 %v554, %v850
      %v856 = vmul.f32 %v555, %v850
      %v857 = vmul.f32 %v556, %v850
      %v858 = vmul.f32 %v557, %v850
      %v859 = vmul.f32 %v558, %v850
      %v860 = vmul.f32 %v559, %v850
      %v861 = vmul.f32 %v560, %v850
      %v862 = vmul.f32 %v561, %v850
      %v863 = vmul.f32 %v562, %v850
      %v864 = vmul.f32 %v563, %v850
      %v865 = vmul.f32 %v564, %v850
      %v866 = vmul.f32 %v565, %v850
      %v867 = vadd.f32 %v831, %v851
      %v868 = vadd.f32 %v832, %v852
      %v869 = vadd.f32 %v833, %v853
      %v870 = vadd.f32 %v834, %v854
      %v871 = vadd.f32 %v835, %v855
      %v872 = vadd.f32 %v836, %v856
      %v873 = vadd.f32 %v837, %v857
      %v874 = vadd.f32 %v838, %v858
      %v875 = vadd.f32 %v839, %v859
      %v876 = vadd.f32 %v840, %v860
      %v877 = vadd.f32 %v841, %v861
      %v878 = vadd.f32 %v842, %v862
      %v879 = vadd.f32 %v843, %v863
      %v880 = vadd.f32 %v844, %v864
      %v881 = vadd.f32 %v845, %v865
      %v882 = vadd.f32 %v846, %v866
      %v883 = vlaneseq
      %v884 = vshrl.u32 %v883, 7
      %v885 = vsub.s32 7, %v884
      %v886 = vrot.slane %v629, %v885
      %v887 = vmul.f32 %v466, %v886
      %v888 = vmul.f32 %v467, %v886
      %v889 = vmul.f32 %v468, %v886
      %v890 = vmul.f32 %v469, %v886
      %v891 = vmul.f32 %v470, %v886
      %v892 = vmul.f32 %v471, %v886
      %v893 = vmul.f32 %v472, %v886
      %v894 = vmul.f32 %v473, %v886
      %v895 = vmul.f32 %v474, %v886
      %v896 = vmul.f32 %v475, %v886
      %v897 = vmul.f32 %v476, %v886
      %v898 = vmul.f32 %v477, %v886
      %v899 = vmul.f32 %v478, %v886
      %v900 = vmul.f32 %v479, %v886
      %v901 = vmul.f32 %v498, %v886
      %v902 = vmul.f32 %v499, %v886
      %v903 = vadd.f32 %v867, %v887
      %v904 = vadd.f32 %v868, %v888
      %v905 = vadd.f32 %v869, %v889
      %v906 = vadd.f32 %v870, %v890
      %v907 = vadd.f32 %v871, %v891
      %v908 = vadd.f32 %v872, %v892
      %v909 = vadd.f32 %v873, %v893
      %v910 = vadd.f32 %v874, %v894
      %v911 = vadd.f32 %v875, %v895
      %v912 = vadd.f32 %v876, %v896
      %v913 = vadd.f32 %v877, %v897
      %v914 = vadd.f32 %v878, %v898
      %v915 = vadd.f32 %v879, %v899
      %v916 = vadd.f32 %v880, %v900
      %v917 = vadd.f32 %v881, %v901
      %v918 = vadd.f32 %v882, %v902
      %v919 = vlaneseq
      %v920 = vshrl.u32 %v919, 7
      %v921 = vsub.s32 0, %v920
      %v922 = vrot.slane %v630, %v921
      %v923 = vmul.f32 %v613, %v922
      %v924 = vmul.f32 %v614, %v922
      %v925 = vmul.f32 %v615, %v922
      %v926 = vmul.f32 %v616, %v922
      %v927 = vmul.f32 %v617, %v922
      %v928 = vmul.f32 %v618, %v922
      %v929 = vmul.f32 %v619, %v922
      %v930 = vmul.f32 %v620, %v922
      %v931 = vmul.f32 %v621, %v922
      %v932 = vmul.f32 %v622, %v922
      %v933 = vmul.f32 %v623, %v922
      %v934 = vmul.f32 %v624, %v922
      %v935 = vmul.f32 %v625, %v922
      %v936 = vmul.f32 %v626, %v922
      %v937 = vmul.f32 %v627, %v922
      %v938 = vmul.f32 %v628, %v922
      %v939 = vadd.f32 %v903, %v923
      %v940 = vadd.f32 %v904, %v924
      %v941 = vadd.f32 %v905, %v925
      %v942 = vadd.f32 %v906, %v926
      %v943 = vadd.f32 %v907, %v927
      %v944 = vadd.f32 %v908, %v928
      %v945 = vadd.f32 %v909, %v929
      %v946 = vadd.f32 %v910, %v930
      %v947 = vadd.f32 %v911, %v931
      %v948 = vadd.f32 %v912, %v932
      %v949 = vadd.f32 %v913, %v933
      %v950 = vadd.f32 %v914, %v934
      %v951 = vadd.f32 %v915, %v935
      %v952 = vadd.f32 %v916, %v936
      %v953 = vadd.f32 %v917, %v937
      %v954 = vadd.f32 %v918, %v938
      %v955 = vld [vmem:[%s4] sm:$0x1]
      %v957 = vlaneseq
      %v958 = vshrl.u32 %v957, 7
      %v959 = vsub.s32 0, %v958
      %v960 = vrot.slane %v955, %v959
      %v962 = vadd.f32 %v939, %v960
      %v963 = vadd.f32 %v940, %v960
      %v964 = vadd.f32 %v941, %v960
      %v965 = vadd.f32 %v942, %v960
      %v966 = vadd.f32 %v943, %v960
      %v967 = vadd.f32 %v944, %v960
      %v968 = vadd.f32 %v945, %v960
      %v969 = vadd.f32 %v946, %v960
      %v970 = vadd.f32 %v947, %v960
      %v971 = vadd.f32 %v948, %v960
      %v972 = vadd.f32 %v949, %v960
      %v973 = vadd.f32 %v950, %v960
      %v974 = vadd.f32 %v951, %v960
      %v975 = vadd.f32 %v952, %v960
      %v976 = vadd.f32 %v953, %v960
      %v977 = vadd.f32 %v954, %v960
      %v978 = vpack.c.bf16 %v963, %v962
      %v979 = vpack.c.bf16 %v965, %v964
      %v980 = vpack.c.bf16 %v967, %v966
      %v981 = vpack.c.bf16 %v969, %v968
      %v982 = vpack.c.bf16 %v971, %v970
      %v983 = vpack.c.bf16 %v973, %v972
      %v984 = vpack.c.bf16 %v975, %v974
      %v985 = vpack.c.bf16 %v977, %v976
      %v986 = vld [vmem:[%s5] sm:$0xf]
      %v987 = vld [vmem:[%s5 + $0x4] sm:$0xf]
      %v988 = vld [vmem:[%s5 + $0x8] sm:$0xf]
      %v989 = vld [vmem:[%s5 + $0xc] sm:$0xf]
      %v990 = vld [vmem:[%s5 + $0x10] sm:$0xf]
      %v991 = vld [vmem:[%s5 + $0x14] sm:$0xf]
      %v992 = vld [vmem:[%s5 + $0x18] sm:$0xf]
      %v993 = vld [vmem:[%s5 + $0x1c] sm:$0xf]
      %v994 = vld [vmem:[%s6] sm:$0x1]
      %v996 = vlaneseq
      %v997 = vshrl.u32 %v996, 7
      %v998 = vsub.s32 0, %v997
      %v999 = vrot.slane %v994, %v998
      %v1009 = vunpack.c.l.b16 %v986
      %v1010 = vunpack.c.l.b16 %v987
      %v1011 = vunpack.c.l.b16 %v988
      %v1012 = vunpack.c.l.b16 %v989
      %v1013 = vunpack.c.l.b16 %v990
      %v1014 = vunpack.c.l.b16 %v991
      %v1015 = vunpack.c.l.b16 %v992
      %v1016 = vunpack.c.l.b16 %v993
      %v1017 = vpack.c.b16 %v1010, %v1009
      %v1018 = vpack.c.b16 %v1012, %v1011
      %v1019 = vpack.c.b16 %v1014, %v1013
      %v1020 = vpack.c.b16 %v1016, %v1015
      %vm1025 = vcmask 523264
      %v1027 = vsel %vm1025, %v978, 0
      %v1030 = vsel %vm1025, %v979, 0
      %v1033 = vsel %vm1025, %v980, 0
      %v1036 = vsel %vm1025, %v981, 0
      %v1039 = vsel %vm1025, %v982, 0
      %v1042 = vsel %vm1025, %v983, 0
      %v1045 = vsel %vm1025, %v984, 0
      %v1048 = vsel %vm1025, %v985, 0
      %1050 = vmatprep.subr.bf16.mxu0 0
      %1051 = vmatpush1.bf16.msra.mxu0 0
      %1052 = vmatprep.subr.bf16.mxu0 0
      %1053 = vmatpush1.bf16.msra.mxu0 0
      %1054 = vmatprep.subr.bf16.mxu0 0
      %1055 = vmatpush1.bf16.msra.mxu0 0
      %1056 = vmatprep.subr.bf16.mxu0 0
      %1057 = vmatpush1.bf16.msra.mxu0 0
      %1058 = vmatprep.subr.bf16.mxu0 0
      %1059 = vmatpush1.bf16.msra.mxu0 %v1020
      %1060 = vmatprep.subr.bf16.mxu0 0
      %1061 = vmatpush1.bf16.msra.mxu0 %v1019
      %1062 = vmatprep.subr.bf16.mxu0 0
      %1063 = vmatpush1.bf16.msra.mxu0 %v1018
      %1064 = vmatprep.subr.bf16.mxu0 0
      %1065 = vmatpush1.bf16.msra.mxu0 %v1017
      %1066 = vmatprep.subr.bf16.mxu0 0
      %1067 = vmatpush2.bf16.msra.mxu0 0
      %1068 = vmatprep.subr.bf16.mxu0 0
      %1069 = vmatpush2.bf16.msra.mxu0 0
      %1070 = vmatprep.subr.bf16.mxu0 0
      %1071 = vmatpush2.bf16.msra.mxu0 0
      %1072 = vmatprep.subr.bf16.mxu0 0
      %1073 = vmatpush2.bf16.msra.mxu0 0
      %1074 = vmatprep.subr.bf16.mxu0 0
      %1075 = vmatpush2.bf16.msra.mxu0 0
      %1076 = vmatprep.subr.bf16.mxu0 0
      %1077 = vmatpush2.bf16.msra.mxu0 0
      %1078 = vmatprep.subr.bf16.mxu0 0
      %1079 = vmatpush2.bf16.msra.mxu0 0
      %1080 = vmatprep.subr.bf16.mxu0 0
      %1081 = vmatpush2.bf16.msra.mxu0 0
      %1082 = vmatprep.mubr.bf16.mxu0 0
      %1083 = vmatmul.mubr.bf16.gmra.mxu0 %v1027
      %v1084 = vpop.f32.mrf.mxu0
      %v1085 = vadd.f32 %v999, %v1084
      %v1086 = vpop.f32.mrf.mxu0
      %v1087 = vpop.f32.mrf.mxu0
      %v1088 = vadd.f32 %v999, %v1087
      %v1089 = vpop.f32.mrf.mxu0
      %1090 = vmatprep.mubr.bf16.mxu0 0
      %1091 = vmatmul.mubr.bf16.gmra.mxu0 %v1030
      %v1092 = vpop.f32.mrf.mxu0
      %v1093 = vadd.f32 %v999, %v1092
      %v1094 = vpop.f32.mrf.mxu0
      %v1095 = vpop.f32.mrf.mxu0
      %v1096 = vadd.f32 %v999, %v1095
      %v1097 = vpop.f32.mrf.mxu0
      %1098 = vmatprep.mubr.bf16.mxu0 0
      %1099 = vmatmul.mubr.bf16.gmra.mxu0 %v1033
      %v1100 = vpop.f32.mrf.mxu0
      %v1101 = vadd.f32 %v999, %v1100
      %v1102 = vpop.f32.mrf.mxu0
      %v1103 = vpop.f32.mrf.mxu0
      %v1104 = vadd.f32 %v999, %v1103
      %v1105 = vpop.f32.mrf.mxu0
      %1106 = vmatprep.mubr.bf16.mxu0 0
      %1107 = vmatmul.mubr.bf16.gmra.mxu0 %v1036
      %v1108 = vpop.f32.mrf.mxu0
      %v1109 = vadd.f32 %v999, %v1108
      %v1110 = vpop.f32.mrf.mxu0
      %v1111 = vpop.f32.mrf.mxu0
      %v1112 = vadd.f32 %v999, %v1111
      %v1113 = vpop.f32.mrf.mxu0
      %1114 = vmatprep.mubr.bf16.mxu0 0
      %1115 = vmatmul.mubr.bf16.gmra.mxu0 %v1039
      %v1116 = vpop.f32.mrf.mxu0
      %v1117 = vadd.f32 %v999, %v1116
      %v1118 = vpop.f32.mrf.mxu0
      %v1119 = vpop.f32.mrf.mxu0
      %v1120 = vadd.f32 %v999, %v1119
      %v1121 = vpop.f32.mrf.mxu0
      %1122 = vmatprep.mubr.bf16.mxu0 0
      %1123 = vmatmul.mubr.bf16.gmra.mxu0 %v1042
      %v1124 = vpop.f32.mrf.mxu0
      %v1125 = vadd.f32 %v999, %v1124
      %v1126 = vpop.f32.mrf.mxu0
      %v1127 = vpop.f32.mrf.mxu0
      %v1128 = vadd.f32 %v999, %v1127
      %v1129 = vpop.f32.mrf.mxu0
      %1130 = vmatprep.mubr.bf16.mxu0 0
      %1131 = vmatmul.mubr.bf16.gmra.mxu0 %v1045
      %v1132 = vpop.f32.mrf.mxu0
      %v1133 = vadd.f32 %v999, %v1132
      %v1134 = vpop.f32.mrf.mxu0
      %v1135 = vpop.f32.mrf.mxu0
      %v1136 = vadd.f32 %v999, %v1135
      %v1137 = vpop.f32.mrf.mxu0
      %1138 = vmatprep.mubr.bf16.mxu0 0
      %1139 = vmatmul.mubr.bf16.gmra.mxu0 %v1048
      %v1140 = vpop.f32.mrf.mxu0
      %v1141 = vadd.f32 %v999, %v1140
      %v1142 = vpop.f32.mrf.mxu0
      %v1143 = vpop.f32.mrf.mxu0
      %v1144 = vadd.f32 %v999, %v1143
      %v1145 = vpop.f32.mrf.mxu0
      %1146 = vdwg.mxu0
      %v1147 = vpack.c.bf16 %v1088, %v1085
      %v1148 = vpack.c.bf16 %v1096, %v1093
      %v1149 = vpack.c.bf16 %v1104, %v1101
      %v1150 = vpack.c.bf16 %v1112, %v1109
      %v1151 = vpack.c.bf16 %v1120, %v1117
      %v1152 = vpack.c.bf16 %v1128, %v1125
      %v1153 = vpack.c.bf16 %v1136, %v1133
      %v1154 = vpack.c.bf16 %v1144, %v1141
      %v1163 = vunpack.c.l.b16 %v1147
      %v1164 = vunpack.c.h.b16 %v1147
      %v1165 = vunpack.c.l.b16 %v1148
      %v1166 = vunpack.c.h.b16 %v1148
      %v1167 = vunpack.c.l.b16 %v1149
      %v1168 = vunpack.c.h.b16 %v1149
      %v1169 = vunpack.c.l.b16 %v1150
      %v1170 = vunpack.c.h.b16 %v1150
      %v1171 = vunpack.c.l.b16 %v1151
      %v1172 = vunpack.c.h.b16 %v1151
      %v1173 = vunpack.c.l.b16 %v1152
      %v1174 = vunpack.c.h.b16 %v1152
      %v1175 = vunpack.c.l.b16 %v1153
      %v1176 = vunpack.c.h.b16 %v1153
      %v1177 = vunpack.c.l.b16 %v1154
      %v1178 = vunpack.c.h.b16 %v1154
      %v1179 = vpack.c.b16 %v1163, %v1163
      %v1180 = vpack.c.b16 %v1164, %v1164
      %v1181 = vpack.c.b16 %v1165, %v1165
      %v1182 = vpack.c.b16 %v1166, %v1166
      %v1183 = vpack.c.b16 %v1167, %v1167
      %v1184 = vpack.c.b16 %v1168, %v1168
      %v1185 = vpack.c.b16 %v1169, %v1169
      %v1186 = vpack.c.b16 %v1170, %v1170
      %v1187 = vpack.c.b16 %v1171, %v1171
      %v1188 = vpack.c.b16 %v1172, %v1172
      %v1189 = vpack.c.b16 %v1173, %v1173
      %v1190 = vpack.c.b16 %v1174, %v1174
      %v1191 = vpack.c.b16 %v1175, %v1175
      %v1192 = vpack.c.b16 %v1176, %v1176
      %v1193 = vpack.c.b16 %v1177, %v1177
      %v1194 = vpack.c.b16 %v1178, %v1178
      %1211 = vst [vmem:[%s445] sm:$0xf] %v1179
      %1212 = vst [vmem:[%s445 + $0x4] sm:$0xf] %v1180
      %1213 = vst [vmem:[%s445 + $0x8] sm:$0xf] %v1181
      %1214 = vst [vmem:[%s445 + $0xc] sm:$0xf] %v1182
      %1215 = vst [vmem:[%s445 + $0x10] sm:$0xf] %v1183
      %1216 = vst [vmem:[%s445 + $0x14] sm:$0xf] %v1184
      %1217 = vst [vmem:[%s445 + $0x18] sm:$0xf] %v1185
      %1218 = vst [vmem:[%s445 + $0x1c] sm:$0xf] %v1186
      %1219 = vst [vmem:[%s445 + $0x20] sm:$0xf] %v1187
      %1220 = vst [vmem:[%s445 + $0x24] sm:$0xf] %v1188
      %1221 = vst [vmem:[%s445 + $0x28] sm:$0xf] %v1189
      %1222 = vst [vmem:[%s445 + $0x2c] sm:$0xf] %v1190
      %1223 = vst [vmem:[%s445 + $0x30] sm:$0xf] %v1191
      %1224 = vst [vmem:[%s445 + $0x34] sm:$0xf] %v1192
      %1225 = vst [vmem:[%s445 + $0x38] sm:$0xf] %v1193
      %1226 = vst [vmem:[%s445 + $0x3c] sm:$0xf] %v1194
      %s1227 = smul.u32 8, %s23
      %p1228 = scmp.lt.s32.totalorder %s22, 1
      %s1229 = scalar_select %p1228, %s22, 1
      %p1230 = scmp.lt.s32.totalorder %s1227, 15
      %s1231 = scalar_select %p1230, %s1227, 15
      %s1232 = smul.addr %s1231, 2
      %s1233 = smul.addr %s1229, 32
      %s1234 = sadd.s32 %s1232, %s1233
      %s1235 = smul.addr %s1234, 4
      %s1236 = scalar_lea.vmem %s7, %s1235
      // Predicated region
      $region49: #{_lambda_.1} parent=47 // pred_check
        %p1237 = pneg %p234
      $region50: #{_lambda_.1} parent=47 // pred_check_branch
        %1239 = sbr.rel (%p1237) target = $region52
      $region51: #{_lambda_.1} parent=47 // pred_region
        %s1240 = smul.u32 8, %s23
      $region52: #{_lambda_.1} parent=47 // pred_fallthru
        _
    $region48: #{_lambda_.1} parent=5 // pred_fallthru
      _
    %p1241 = scmp.le.s32.totalorder 2, %s13
    // Predicated region
    $region53: #{_lambda_.1} parent=5 // pred_check
      %p1242 = pneg %p1241
    $region54: #{_lambda_.1} parent=5 // pred_check_branch
      %1244 = sbr.rel (%p1242) target = $region56
    $region55: #{_lambda_.1} parent=5 // pred_region
      %s1245 = ssub.s32 %s13, 2
      // Predicated region
      $region57: #{_lambda_.1} parent=55 // pred_check
        %p1246 = pneg %p240
      $region58: #{_lambda_.1} parent=55 // pred_check_branch
        %1248 = sbr.rel (%p1246) target = $region60
      $region59: #{_lambda_.1} parent=55 // pred_region
        %s1249 = smul.u32 8, %s25
        %p1250 = scmp.lt.s32.totalorder %s24, 1
        %s1251 = scalar_select %p1250, %s24, 1
        %p1252 = scmp.lt.s32.totalorder %s1249, 15
        %s1253 = scalar_select %p1252, %s1249, 15
        %s1254 = smul.addr %s1253, 2
        %s1255 = smul.addr %s1251, 32
        %s1256 = sadd.s32 %s1254, %s1255
        %s1257 = smul.addr %s1256, 4
        %s1258 = scalar_lea.vmem %s7, %s1257
      $region60: #{_lambda_.1} parent=55 // pred_fallthru
        _
    $region56: #{_lambda_.1} parent=5 // pred_fallthru
      _
  $region6: #{_lambda_.1} parent=0 // loop_footer
    %s17 = sadd.s32 1, %s13
  $region7: #{_lambda_.1} parent=0 // loop_footer_branch
    %12 = sbr.rel target = $region3
  $region8: #{_lambda_.1} parent=0 // loop_exit
    _

</llo_original>
